<compile_context>
chip_gen: v5e
topology: v5e:2x2
jax: 0.10.0
libtpu: 0.0.40
codegen_flags: <defaults>
</compile_context>

<pallas_src>
import jax
import jax.numpy as jnp
from jax.experimental import pallas as pl
from jax.experimental.pallas import tpu as pltpu

HIDDEN = 64


def _round_up(x, m):
    return ((x + m - 1) // m) * m


def linear_prob_kernel(x_ref, w1_ref, b1_ref, w2_ref, b2_ref, w3_ref, b3_ref, o_ref):
    # x tile: (TB, d) f32 in VMEM. Cast once to bf16 for the MXU (f32 accumulate).
    x = x_ref[...].astype(jnp.bfloat16)

    # linear1 + ReLU (bias/ReLU in f32 on the VPU)
    h1 = jnp.dot(x, w1_ref[...], preferred_element_type=jnp.float32)
    h1 = jnp.maximum(h1 + b1_ref[...], 0.0)

    # linear2 + ReLU
    h2 = jnp.dot(h1.astype(jnp.bfloat16), w2_ref[...], preferred_element_type=jnp.float32)
    h2 = jnp.maximum(h2 + b2_ref[...], 0.0)

    # linear3 (64 -> 1) off the MXU: VPU multiply + XLU lane reduce, SMEM scalar bias.
    o = jnp.sum(h2 * w3_ref[...], axis=-1) + b3_ref[0]          # (TB,)

    # Lane-dense store: batch on lanes, full unmasked vector stores.
    o_ref[...] = o[None, :].astype(o_ref.dtype)


def linear_prob_forward(x, params, *, tb=512):
    """x: (B, d) float32. params: w1 (d,64), b1 (1,64), w2 (64,64), b2 (1,64), w3 (1,64), b3 (1,)."""
    B, d = x.shape

    # bf16 matmul weights (f32 accumulation in-kernel); biases / w3 row stay f32.
    w1 = params["w1"].astype(jnp.bfloat16)
    w2 = params["w2"].astype(jnp.bfloat16)
    b1 = params["b1"].astype(jnp.float32)
    b2 = params["b2"].astype(jnp.float32)
    w3 = params["w3"].astype(jnp.float32)                # (1, 64) row
    b3 = params["b3"].reshape(1).astype(jnp.float32)     # (1,) scalar -> SMEM

    # Batch tile: multiple of 128 (lane-dense output), capped at `tb` (VMEM-friendly on v7x too).
    TB = min(tb, _round_up(B, 128))
    B_pad = _round_up(B, TB)
    if B_pad != B:
        x = jnp.pad(x, ((0, B_pad - B), (0, 0)))
    n_blocks = B_pad // TB

    flops = 2 * B_pad * (d * HIDDEN + HIDDEN * HIDDEN + HIDDEN)
    bytes_accessed = (B_pad * d * 4 + B_pad * 4
                      + (d * HIDDEN + HIDDEN * HIDDEN) * 2 + 3 * HIDDEN * 4)

    out = pl.pallas_call(
        linear_prob_kernel,
        out_shape=jax.ShapeDtypeStruct((1, B_pad), jnp.float32),
        grid=(n_blocks,),
        in_specs=[
            pl.BlockSpec((TB, d), lambda i: (i, 0)),             # x: streamed / double-buffered
            pl.BlockSpec((d, HIDDEN), lambda i: (0, 0)),          # w1: VMEM-resident
            pl.BlockSpec((1, HIDDEN), lambda i: (0, 0)),          # b1
            pl.BlockSpec((HIDDEN, HIDDEN), lambda i: (0, 0)),     # w2
            pl.BlockSpec((1, HIDDEN), lambda i: (0, 0)),          # b2
            pl.BlockSpec((1, HIDDEN), lambda i: (0, 0)),          # w3 row
            pl.BlockSpec(memory_space=pltpu.MemorySpace.SMEM),    # b3 scalar (SMEM)
        ],
        out_specs=pl.BlockSpec((1, TB), lambda i: (0, i)),        # lane-dense output row
        compiler_params=pltpu.CompilerParams(
            dimension_semantics=("parallel",),
            vmem_limit_bytes=32 * 1024 * 1024,
        ),
        cost_estimate=pl.CostEstimate(
            flops=flops, transcendentals=0, bytes_accessed=bytes_accessed),
    )(x, w1, b1, w2, b2, w3, b3)

    return out.reshape(B_pad)[:B].reshape(B, 1)


def init_params(d, key):
    """Deterministic init mimicking nn.Linear default (uniform +/- 1/sqrt(fan_in))."""
    keys = jax.random.split(key, 6)

    def linear_init(kw, kb, fan_in, fan_out):
        bound = 1.0 / jnp.sqrt(jnp.float32(fan_in))
        w = jax.random.uniform(kw, (fan_in, fan_out), jnp.float32, -bound, bound)  # (in, out)
        b = jax.random.uniform(kb, (1, fan_out), jnp.float32, -bound, bound)
        return w, b

    w1, b1 = linear_init(keys[0], keys[1], d, HIDDEN)
    w2, b2 = linear_init(keys[2], keys[3], HIDDEN, HIDDEN)
    w3_col, b3 = linear_init(keys[4], keys[5], HIDDEN, 1)          # (64, 1), (1, 1)
    return {"w1": w1, "b1": b1, "w2": w2, "b2": b2,
            "w3": w3_col.T,                                        # stored as (1, 64) row
            "b3": b3.reshape(1)}


def reference(x, p):
    h1 = jnp.maximum(x @ p["w1"] + p["b1"], 0.0)
    h2 = jnp.maximum(h1 @ p["w2"] + p["b2"], 0.0)
    return h2 @ p["w3"].T + p["b3"]


if __name__ == "__main__":
    key = jax.random.PRNGKey(0)
    k_x, k_p, k_x2 = jax.random.split(key, 3)

    B, d = 8, 32  # small shapes: batch=8, input feature dim d=32
    x = jax.random.normal(k_x, (B, d), dtype=jnp.float32)
    params = init_params(d, k_p)

    out = jax.block_until_ready(linear_prob_forward(x, params))
    ref = reference(x, params)
    assert out.shape == (B, 1)
    # bf16 MXU inputs with f32 accumulation -> loosened tolerance vs f32 reference
    assert jnp.allclose(out, ref, atol=2e-2, rtol=2e-2), float(jnp.max(jnp.abs(out - ref)))

    # exercise padding and a multi-step (pipelined) batch grid
    B2 = 1000
    x2 = jax.random.normal(k_x2, (B2, d), dtype=jnp.float32)
    out2 = jax.block_until_ready(linear_prob_forward(x2, params))
    ref2 = reference(x2, params)
    assert out2.shape == (B2, 1)
    assert jnp.allclose(out2, ref2, atol=2e-2, rtol=2e-2), float(jnp.max(jnp.abs(out2 - ref2)))

    print("KERNEL_OK")
</pallas_src>

<mosaic_0001>
module attributes {stable_mosaic.version = 11 : i64} {
  func.func @linear_prob_kernel(%arg0: i32, %arg1: memref<128x32xf32, #tpu.memory_space<vmem>>, %arg2: memref<32x64xbf16, #tpu.memory_space<vmem>>, %arg3: memref<1x64xf32, #tpu.memory_space<vmem>>, %arg4: memref<64x64xbf16, #tpu.memory_space<vmem>>, %arg5: memref<1x64xf32, #tpu.memory_space<vmem>>, %arg6: memref<1x64xf32, #tpu.memory_space<vmem>>, %arg7: memref<1xf32, #tpu.memory_space<smem>>, %arg8: memref<1x128xf32, #tpu.memory_space<vmem>>) attributes {dimension_semantics = [#tpu.dimension_semantics<parallel>], iteration_bounds = array<i64: 1>, scalar_prefetch = 0 : i64, scratch_operands = 0 : i64, tpu.core_type = #tpu.core_type<tc>, window_params = [{transform_indices = @transform_0, window_bounds = array<i64: 128, 32>}, {pipeline_mode = #tpu.pipeline_mode<synchronous>, transform_indices = @transform_1, window_bounds = array<i64: 32, 64>}, {pipeline_mode = #tpu.pipeline_mode<synchronous>, transform_indices = @transform_2, window_bounds = array<i64: 1, 64>}, {pipeline_mode = #tpu.pipeline_mode<synchronous>, transform_indices = @transform_3, window_bounds = array<i64: 64, 64>}, {pipeline_mode = #tpu.pipeline_mode<synchronous>, transform_indices = @transform_4, window_bounds = array<i64: 1, 64>}, {pipeline_mode = #tpu.pipeline_mode<synchronous>, transform_indices = @transform_5, window_bounds = array<i64: 1, 64>}, {transform_indices = @transform_6, window_bounds = array<i64: 1>}, {transform_indices = @transform_7, window_bounds = array<i64: 1, 128>}]} {
    %c0 = arith.constant 0 : index
    %c0_0 = arith.constant 0 : index
    %0 = vector.load %arg1[%c0, %c0_0] : memref<128x32xf32, #tpu.memory_space<vmem>>, vector<128x32xf32>
    %1 = arith.truncf %0 : vector<128x32xf32> to vector<128x32xbf16>
    %c0_1 = arith.constant 0 : index
    %c0_2 = arith.constant 0 : index
    %2 = vector.load %arg2[%c0_1, %c0_2] : memref<32x64xbf16, #tpu.memory_space<vmem>>, vector<32x64xbf16>
    %cst = arith.constant dense<0.000000e+00> : vector<128x64xf32>
    %3 = tpu.matmul %1, %2, %cst {dimension_numbers = #tpu.dot_dimension_numbers<[1], [0], [0], [1], [0, 0, 1, 1], [], []>} : vector<128x32xbf16>, vector<32x64xbf16>, vector<128x64xf32> -> vector<128x64xf32>
    %c0_3 = arith.constant 0 : index
    %c0_4 = arith.constant 0 : index
    %4 = vector.load %arg3[%c0_3, %c0_4] : memref<1x64xf32, #tpu.memory_space<vmem>>, vector<1x64xf32>
    %5 = vector.broadcast %4 : vector<1x64xf32> to vector<128x64xf32>
    %6 = arith.addf %3, %5 : vector<128x64xf32>
    %cst_5 = arith.constant 0.000000e+00 : f32
    %7 = vector.broadcast %cst_5 : f32 to vector<128x64xf32>
    %8 = arith.maximumf %6, %7 : vector<128x64xf32>
    %9 = arith.truncf %8 : vector<128x64xf32> to vector<128x64xbf16>
    %c0_6 = arith.constant 0 : index
    %c0_7 = arith.constant 0 : index
    %10 = vector.load %arg4[%c0_6, %c0_7] : memref<64x64xbf16, #tpu.memory_space<vmem>>, vector<64x64xbf16>
    %cst_8 = arith.constant dense<0.000000e+00> : vector<128x64xf32>
    %11 = tpu.matmul %9, %10, %cst_8 {dimension_numbers = #tpu.dot_dimension_numbers<[1], [0], [0], [1], [0, 0, 1, 1], [], []>} : vector<128x64xbf16>, vector<64x64xbf16>, vector<128x64xf32> -> vector<128x64xf32>
    %c0_9 = arith.constant 0 : index
    %c0_10 = arith.constant 0 : index
    %12 = vector.load %arg5[%c0_9, %c0_10] : memref<1x64xf32, #tpu.memory_space<vmem>>, vector<1x64xf32>
    %13 = vector.broadcast %12 : vector<1x64xf32> to vector<128x64xf32>
    %14 = arith.addf %11, %13 : vector<128x64xf32>
    %cst_11 = arith.constant 0.000000e+00 : f32
    %15 = vector.broadcast %cst_11 : f32 to vector<128x64xf32>
    %16 = arith.maximumf %14, %15 : vector<128x64xf32>
    %c0_12 = arith.constant 0 : index
    %c0_13 = arith.constant 0 : index
    %17 = vector.load %arg6[%c0_12, %c0_13] : memref<1x64xf32, #tpu.memory_space<vmem>>, vector<1x64xf32>
    %18 = vector.broadcast %17 : vector<1x64xf32> to vector<128x64xf32>
    %19 = arith.mulf %16, %18 : vector<128x64xf32>
    %cst_14 = arith.constant dense<0.000000e+00> : vector<128xf32>
    %20 = vector.multi_reduction <add>, %19, %cst_14 [1] : vector<128x64xf32> to vector<128xf32>
    %c0_15 = arith.constant 0 : index
    %21 = memref.load %arg7[%c0_15] : memref<1xf32, #tpu.memory_space<smem>>
    %22 = vector.broadcast %21 : f32 to vector<128xf32>
    %23 = arith.addf %20, %22 : vector<128xf32>
    %24 = vector.shape_cast %23 : vector<128xf32> to vector<1x128xf32>
    %c0_16 = arith.constant 0 : index
    %c0_17 = arith.constant 0 : index
    %25 = vector.load %arg8[%c0_16, %c0_17] : memref<1x128xf32, #tpu.memory_space<vmem>>, vector<1x128xf32>
    tpu.vector_store %arg8[%c0_16, %c0_17], %24 {strides = array<i32>} : memref<1x128xf32, #tpu.memory_space<vmem>>, vector<1x128xf32>,
    return
  }
  func.func @transform_0(%arg0: i32) -> (i32, i32) {
    %c0_i32 = arith.constant 0 : i32
    %c0_i32_0 = arith.constant 0 : i32
    return %arg0, %c0_i32 : i32, i32
  }
  func.func @transform_1(%arg0: i32) -> (i32, i32) {
    %c0_i32 = arith.constant 0 : i32
    %c0_i32_0 = arith.constant 0 : i32
    %c0_i32_1 = arith.constant 0 : i32
    return %c0_i32, %c0_i32_0 : i32, i32
  }
  func.func @transform_2(%arg0: i32) -> (i32, i32) {
    %c0_i32 = arith.constant 0 : i32
    %c0_i32_0 = arith.constant 0 : i32
    %c0_i32_1 = arith.constant 0 : i32
    return %c0_i32, %c0_i32_0 : i32, i32
  }
  func.func @transform_3(%arg0: i32) -> (i32, i32) {
    %c0_i32 = arith.constant 0 : i32
    %c0_i32_0 = arith.constant 0 : i32
    %c0_i32_1 = arith.constant 0 : i32
    return %c0_i32, %c0_i32_0 : i32, i32
  }
  func.func @transform_4(%arg0: i32) -> (i32, i32) {
    %c0_i32 = arith.constant 0 : i32
    %c0_i32_0 = arith.constant 0 : i32
    %c0_i32_1 = arith.constant 0 : i32
    return %c0_i32, %c0_i32_0 : i32, i32
  }
  func.func @transform_5(%arg0: i32) -> (i32, i32) {
    %c0_i32 = arith.constant 0 : i32
    %c0_i32_0 = arith.constant 0 : i32
    %c0_i32_1 = arith.constant 0 : i32
    return %c0_i32, %c0_i32_0 : i32, i32
  }
  func.func @transform_6(%arg0: i32) -> i32 {
    %c0_i32 = arith.constant 0 : i32
    %c0_i32_0 = arith.constant 0 : i32
    return %c0_i32 : i32
  }
  func.func @transform_7(%arg0: i32) -> (i32, i32) {
    %c0_i32 = arith.constant 0 : i32
    %c0_i32_0 = arith.constant 0 : i32
    return %c0_i32, %arg0 : i32, i32
  }
}

</mosaic_0001>

<llo_original>
// kernel: tpu_custom_call.1
$region0: #{tpu_custom_call.1}
  #allocation0 [shape = 'u32[]', space=smem, size = 0x4, offset = 0x4, fixed_abs, tag = 'smem constant byte address 0x4 - core index']
  #allocation1 [shape = 'u32[72,128]{1,0:T(1,128)}', space=vmem, size = 0x9000, scoped, tag = 'internal scratch']
  #allocation2 [shape = 'f32[1]{0:T(128)S(6)}', space=smem, size = 0x200, scoped, tag = 'scoped memory for tpu_custom_call.1']
  %s0 = inlined_call_operand.vmem [shape: f32[128,32], index: 0, kind: input, shape index: {}]
  %s1 = inlined_call_operand.vmem [shape: bf16[32,64], index: 1, kind: input, shape index: {}]
  %s2 = inlined_call_operand.vmem [shape: f32[1,64], index: 2, kind: input, shape index: {}]
  %s3 = inlined_call_operand.vmem [shape: bf16[64,64], index: 3, kind: input, shape index: {}]
  %s4 = inlined_call_operand.vmem [shape: f32[1,64], index: 4, kind: input, shape index: {}]
  %s5 = inlined_call_operand.vmem [shape: f32[1,64], index: 5, kind: input, shape index: {}]
  %s6 = inlined_call_operand.<no memory space> [shape: f32[1], index: 6, kind: input, shape index: {}]
  %s7 = inlined_call_operand.hbm [shape: f32[1,128], index: 7, kind: output, shape index: {}]
  %s8 = sld [smem:[#allocation0]]
  $region38: #{tpu_custom_call.1} parent=0
    _
  %s10 = ssub.s32 1, %s8
  %s11 = scalar_select 0, %s10, %s8
  %12 = sst [smem:[#allocation2]] %s6
  $region1: #{tpu_custom_call.1} parent=0
    #allocation3 [shape = 'u8[512]{0}', space=vmem, size = 0x400, scoped, tag = 'output window, operand 0, single buffered']
    #allocation4 [shape = 's32[1]{0}', space=sflag, size = 0x4, scoped, tag = 'scoped memory for tpu_custom_call.1']
    %13 = vsyncpa [#allocation4], 0
    // Predicated region
    $region2: #{tpu_custom_call.1} parent=1 // pred_check
      _
    $region3: #{tpu_custom_call.1} parent=1 // pred_check_branch
      %15 = sbr.rel (0) target = $region5
    $region4: #{tpu_custom_call.1} parent=1 // pred_region
      _
    $region5: #{tpu_custom_call.1} parent=1 // pred_fallthru
      _
    // Predicated region
    $region6: #{tpu_custom_call.1} parent=1 // pred_check
      _
    $region7: #{tpu_custom_call.1} parent=1 // pred_check_branch
      %17 = sbr.rel (0) target = $region9
    $region8: #{tpu_custom_call.1} parent=1 // pred_region
      _
    $region9: #{tpu_custom_call.1} parent=1 // pred_fallthru
      _
    // Predicated region
    $region10: #{tpu_custom_call.1} parent=1 // pred_check
      _
    $region11: #{tpu_custom_call.1} parent=1 // pred_check_branch
      %19 = sbr.rel (0) target = $region13
    $region12: #{tpu_custom_call.1} parent=1 // pred_region
      _
    $region13: #{tpu_custom_call.1} parent=1 // pred_fallthru
      _
    // Predicated region
    $region14: #{tpu_custom_call.1} parent=1 // pred_check
      _
    $region15: #{tpu_custom_call.1} parent=1 // pred_check_branch
      %21 = sbr.rel (0) target = $region17
    $region16: #{tpu_custom_call.1} parent=1 // pred_region
      _
    $region17: #{tpu_custom_call.1} parent=1 // pred_fallthru
      _
    // Predicated region
    $region18: #{tpu_custom_call.1} parent=1 // pred_check
      _
    $region19: #{tpu_custom_call.1} parent=1 // pred_check_branch
      %23 = sbr.rel (0) target = $region21
    $region20: #{tpu_custom_call.1} parent=1 // pred_region
      _
    $region21: #{tpu_custom_call.1} parent=1 // pred_fallthru
      _
    // Predicated region
    $region22: #{tpu_custom_call.1} parent=1 // pred_check
      _
    $region23: #{tpu_custom_call.1} parent=1 // pred_check_branch
      %25 = sbr.rel (0) target = $region25
    $region24: #{tpu_custom_call.1} parent=1 // pred_region
      _
    $region25: #{tpu_custom_call.1} parent=1 // pred_fallthru
      _
    // Predicated region
    $region26: #{tpu_custom_call.1} parent=1 // pred_check
      _
    $region27: #{tpu_custom_call.1} parent=1 // pred_check_branch
      %27 = sbr.rel (0) target = $region29
    $region28: #{tpu_custom_call.1} parent=1 // pred_region
      _
    $region29: #{tpu_custom_call.1} parent=1 // pred_fallthru
      _
    %v29 = vld [vmem:[%s0] sm:$0xff]
    %v30 = vld [vmem:[%s0 + $0x8] sm:$0xff]
    %v31 = vld [vmem:[%s0 + $0x10] sm:$0xff]
    %v32 = vld [vmem:[%s0 + $0x18] sm:$0xff]
    %v33 = vld [vmem:[%s0 + $0x20] sm:$0xff]
    %v34 = vld [vmem:[%s0 + $0x28] sm:$0xff]
    %v35 = vld [vmem:[%s0 + $0x30] sm:$0xff]
    %v36 = vld [vmem:[%s0 + $0x38] sm:$0xff]
    %v37 = vld [vmem:[%s0 + $0x40] sm:$0xff]
    %v38 = vld [vmem:[%s0 + $0x48] sm:$0xff]
    %v39 = vld [vmem:[%s0 + $0x50] sm:$0xff]
    %v40 = vld [vmem:[%s0 + $0x58] sm:$0xff]
    %v41 = vld [vmem:[%s0 + $0x60] sm:$0xff]
    %v42 = vld [vmem:[%s0 + $0x68] sm:$0xff]
    %v43 = vld [vmem:[%s0 + $0x70] sm:$0xff]
    %v44 = vld [vmem:[%s0 + $0x78] sm:$0xff]
    %v45 = vpack.c.bf16 %v30, %v29
    %v46 = vpack.c.bf16 %v32, %v31
    %v47 = vpack.c.bf16 %v34, %v33
    %v48 = vpack.c.bf16 %v36, %v35
    %v49 = vpack.c.bf16 %v38, %v37
    %v50 = vpack.c.bf16 %v40, %v39
    %v51 = vpack.c.bf16 %v42, %v41
    %v52 = vpack.c.bf16 %v44, %v43
    %v53 = vld [vmem:[%s1] sm:$0xf]
    %v54 = vld [vmem:[%s1 + $0x4] sm:$0xf]
    %v55 = vld [vmem:[%s1 + $0x8] sm:$0xf]
    %v56 = vld [vmem:[%s1 + $0xc] sm:$0xf]
    %v57 = vld [vmem:[%s2] sm:$0x1]
    %v59 = vperm.slane %v57, 0
    %v65 = vunpack.c.l.b16 %v53
    %v66 = vunpack.c.l.b16 %v54
    %v67 = vunpack.c.l.b16 %v55
    %v68 = vunpack.c.l.b16 %v56
    %v69 = vpack.c.b16 %v66, %v65
    %v70 = vpack.c.b16 %v68, %v67
    %vm73 = vcmask 261120
    %v75 = vsel %vm73, %v45, 0
    %v78 = vsel %vm73, %v46, 0
    %v81 = vsel %vm73, %v47, 0
    %v84 = vsel %vm73, %v48, 0
    %v87 = vsel %vm73, %v49, 0
    %v90 = vsel %vm73, %v50, 0
    %v93 = vsel %vm73, %v51, 0
    %v96 = vsel %vm73, %v52, 0
    %98 = vmatpush.bf16.msra.mxu0 0
    %99 = vmatpush.bf16.msra.mxu0 0
    %100 = vmatpush.bf16.msra.mxu0 0
    %101 = vmatpush.bf16.msra.mxu0 0
    %102 = vmatpush.bf16.msra.mxu0 0
    %103 = vmatpush.bf16.msra.mxu0 0
    %104 = vmatpush.bf16.msra.mxu0 %v70
    %105 = vmatpush.bf16.msra.mxu0 %v69
    %106 = vmatmul.bf16.gmra.mxu0 %v75
    %v107 = vpop.f32.mrf.mxu0
    %v108 = vadd.f32 %v59, %v107
    %v109 = vpop.f32.mrf.mxu0
    %v110 = vadd.f32 %v59, %v109
    %111 = vmatmul.bf16.gmra.mxu0 %v78
    %v112 = vpop.f32.mrf.mxu0
    %v113 = vadd.f32 %v59, %v112
    %v114 = vpop.f32.mrf.mxu0
    %v115 = vadd.f32 %v59, %v114
    %116 = vmatmul.bf16.gmra.mxu0 %v81
    %v117 = vpop.f32.mrf.mxu0
    %v118 = vadd.f32 %v59, %v117
    %v119 = vpop.f32.mrf.mxu0
    %v120 = vadd.f32 %v59, %v119
    %121 = vmatmul.bf16.gmra.mxu0 %v84
    %v122 = vpop.f32.mrf.mxu0
    %v123 = vadd.f32 %v59, %v122
    %v124 = vpop.f32.mrf.mxu0
    %v125 = vadd.f32 %v59, %v124
    %126 = vmatmul.bf16.gmra.mxu0 %v87
    %v127 = vpop.f32.mrf.mxu0
    %v128 = vadd.f32 %v59, %v127
    %v129 = vpop.f32.mrf.mxu0
    %v130 = vadd.f32 %v59, %v129
    %131 = vmatmul.bf16.gmra.mxu0 %v90
    %v132 = vpop.f32.mrf.mxu0
    %v133 = vadd.f32 %v59, %v132
    %v134 = vpop.f32.mrf.mxu0
    %v135 = vadd.f32 %v59, %v134
    %136 = vmatmul.bf16.gmra.mxu0 %v93
    %v137 = vpop.f32.mrf.mxu0
    %v138 = vadd.f32 %v59, %v137
    %v139 = vpop.f32.mrf.mxu0
    %v140 = vadd.f32 %v59, %v139
    %141 = vmatmul.bf16.gmra.mxu0 %v96
    %v142 = vpop.f32.mrf.mxu0
    %v143 = vadd.f32 %v59, %v142
    %v144 = vpop.f32.mrf.mxu0
    %v145 = vadd.f32 %v59, %v144
    %146 = vdwg.mxu0
    %v147 = vmax.f32 %v108, 0.0
    %v148 = vmax.f32 %v110, 0.0
    %v149 = vmax.f32 %v113, 0.0
    %v150 = vmax.f32 %v115, 0.0
    %v151 = vmax.f32 %v118, 0.0
    %v152 = vmax.f32 %v120, 0.0
    %v153 = vmax.f32 %v123, 0.0
    %v154 = vmax.f32 %v125, 0.0
    %v155 = vmax.f32 %v128, 0.0
    %v156 = vmax.f32 %v130, 0.0
    %v157 = vmax.f32 %v133, 0.0
    %v158 = vmax.f32 %v135, 0.0
    %v159 = vmax.f32 %v138, 0.0
    %v160 = vmax.f32 %v140, 0.0
    %v161 = vmax.f32 %v143, 0.0
    %v162 = vmax.f32 %v145, 0.0
    %v163 = vpack.c.bf16 %v148, %v147
    %v164 = vpack.c.bf16 %v150, %v149
    %v165 = vpack.c.bf16 %v152, %v151
    %v166 = vpack.c.bf16 %v154, %v153
    %v167 = vpack.c.bf16 %v156, %v155
    %v168 = vpack.c.bf16 %v158, %v157
    %v169 = vpack.c.bf16 %v160, %v159
    %v170 = vpack.c.bf16 %v162, %v161
    %v171 = vld [vmem:[%s3] sm:$0xf]
    %v172 = vld [vmem:[%s3 + $0x4] sm:$0xf]
    %v173 = vld [vmem:[%s3 + $0x8] sm:$0xf]
    %v174 = vld [vmem:[%s3 + $0xc] sm:$0xf]
    %v175 = vld [vmem:[%s3 + $0x10] sm:$0xf]
    %v176 = vld [vmem:[%s3 + $0x14] sm:$0xf]
    %v177 = vld [vmem:[%s3 + $0x18] sm:$0xf]
    %v178 = vld [vmem:[%s3 + $0x1c] sm:$0xf]
    %v179 = vld [vmem:[%s4] sm:$0x1]
    %v181 = vperm.slane %v179, 0
    %v191 = vunpack.c.l.b16 %v171
    %v192 = vunpack.c.l.b16 %v172
    %v193 = vunpack.c.l.b16 %v173
    %v194 = vunpack.c.l.b16 %v174
    %v195 = vunpack.c.l.b16 %v175
    %v196 = vunpack.c.l.b16 %v176
    %v197 = vunpack.c.l.b16 %v177
    %v198 = vunpack.c.l.b16 %v178
    %v199 = vpack.c.b16 %v192, %v191
    %v200 = vpack.c.b16 %v194, %v193
    %v201 = vpack.c.b16 %v196, %v195
    %v202 = vpack.c.b16 %v198, %v197
    %vm207 = vcmask 523264
    %v209 = vsel %vm207, %v163, 0
    %v212 = vsel %vm207, %v164, 0
    %v215 = vsel %vm207, %v165, 0
    %v218 = vsel %vm207, %v166, 0
    %v221 = vsel %vm207, %v167, 0
    %v224 = vsel %vm207, %v168, 0
    %v227 = vsel %vm207, %v169, 0
    %v230 = vsel %vm207, %v170, 0
    %232 = vmatpush.bf16.msra.mxu0 0
    %233 = vmatpush.bf16.msra.mxu0 0
    %234 = vmatpush.bf16.msra.mxu0 0
    %235 = vmatpush.bf16.msra.mxu0 0
    %236 = vmatpush.bf16.msra.mxu0 %v202
    %237 = vmatpush.bf16.msra.mxu0 %v201
    %238 = vmatpush.bf16.msra.mxu0 %v200
    %239 = vmatpush.bf16.msra.mxu0 %v199
    %240 = vmatmul.bf16.gmra.mxu0 %v209
    %v241 = vpop.f32.mrf.mxu0
    %v242 = vadd.f32 %v181, %v241
    %v243 = vpop.f32.mrf.mxu0
    %v244 = vadd.f32 %v181, %v243
    %245 = vmatmul.bf16.gmra.mxu0 %v212
    %v246 = vpop.f32.mrf.mxu0
    %v247 = vadd.f32 %v181, %v246
    %v248 = vpop.f32.mrf.mxu0
    %v249 = vadd.f32 %v181, %v248
    %250 = vmatmul.bf16.gmra.mxu0 %v215
    %v251 = vpop.f32.mrf.mxu0
    %v252 = vadd.f32 %v181, %v251
    %v253 = vpop.f32.mrf.mxu0
    %v254 = vadd.f32 %v181, %v253
    %255 = vmatmul.bf16.gmra.mxu0 %v218
    %v256 = vpop.f32.mrf.mxu0
    %v257 = vadd.f32 %v181, %v256
    %v258 = vpop.f32.mrf.mxu0
    %v259 = vadd.f32 %v181, %v258
    %260 = vmatmul.bf16.gmra.mxu0 %v221
    %v261 = vpop.f32.mrf.mxu0
    %v262 = vadd.f32 %v181, %v261
    %v263 = vpop.f32.mrf.mxu0
    %v264 = vadd.f32 %v181, %v263
    %265 = vmatmul.bf16.gmra.mxu0 %v224
    %v266 = vpop.f32.mrf.mxu0
    %v267 = vadd.f32 %v181, %v266
    %v268 = vpop.f32.mrf.mxu0
    %v269 = vadd.f32 %v181, %v268
    %270 = vmatmul.bf16.gmra.mxu0 %v227
    %v271 = vpop.f32.mrf.mxu0
    %v272 = vadd.f32 %v181, %v271
    %v273 = vpop.f32.mrf.mxu0
    %v274 = vadd.f32 %v181, %v273
    %275 = vmatmul.bf16.gmra.mxu0 %v230
    %v276 = vpop.f32.mrf.mxu0
    %v277 = vadd.f32 %v181, %v276
    %v278 = vpop.f32.mrf.mxu0
    %v279 = vadd.f32 %v181, %v278
    %280 = vdwg.mxu0
    %v281 = vmax.f32 %v242, 0.0
    %v282 = vmax.f32 %v244, 0.0
    %v283 = vmax.f32 %v247, 0.0
    %v284 = vmax.f32 %v249, 0.0
    %v285 = vmax.f32 %v252, 0.0
    %v286 = vmax.f32 %v254, 0.0
    %v287 = vmax.f32 %v257, 0.0
    %v288 = vmax.f32 %v259, 0.0
    %v289 = vmax.f32 %v262, 0.0
    %v290 = vmax.f32 %v264, 0.0
    %v291 = vmax.f32 %v267, 0.0
    %v292 = vmax.f32 %v269, 0.0
    %v293 = vmax.f32 %v272, 0.0
    %v294 = vmax.f32 %v274, 0.0
    %v295 = vmax.f32 %v277, 0.0
    %v296 = vmax.f32 %v279, 0.0
    %v297 = vld [vmem:[%s5] sm:$0x1]
    %v299 = vperm.slane %v297, 0
    %v301 = vmul.f32 %v281, %v299
    %v302 = vmul.f32 %v282, %v299
    %v303 = vmul.f32 %v283, %v299
    %v304 = vmul.f32 %v284, %v299
    %v305 = vmul.f32 %v285, %v299
    %v306 = vmul.f32 %v286, %v299
    %v307 = vmul.f32 %v287, %v299
    %v308 = vmul.f32 %v288, %v299
    %v309 = vmul.f32 %v289, %v299
    %v310 = vmul.f32 %v290, %v299
    %v311 = vmul.f32 %v291, %v299
    %v312 = vmul.f32 %v292, %v299
    %v313 = vmul.f32 %v293, %v299
    %v314 = vmul.f32 %v294, %v299
    %v315 = vmul.f32 %v295, %v299
    %v316 = vmul.f32 %v296, %v299
    %v317 = vsel %vm207, %v301, 0.0
    %318 = vadd.xlane.f32.xlu0 %v317
    %v319 = vpop.xlane.xlu0 %318
    %v320 = vsel %vm207, %v302, 0.0
    %321 = vadd.xlane.f32.xlu0 %v320
    %v322 = vpop.xlane.xlu0 %321
    %v323 = vsel %vm207, %v303, 0.0
    %324 = vadd.xlane.f32.xlu0 %v323
    %v325 = vpop.xlane.xlu0 %324
    %v326 = vsel %vm207, %v304, 0.0
    %327 = vadd.xlane.f32.xlu0 %v326
    %v328 = vpop.xlane.xlu0 %327
    %v329 = vsel %vm207, %v305, 0.0
    %330 = vadd.xlane.f32.xlu0 %v329
    %v331 = vpop.xlane.xlu0 %330
    %v332 = vsel %vm207, %v306, 0.0
    %333 = vadd.xlane.f32.xlu0 %v332
    %v334 = vpop.xlane.xlu0 %333
    %v335 = vsel %vm207, %v307, 0.0
    %336 = vadd.xlane.f32.xlu0 %v335
    %v337 = vpop.xlane.xlu0 %336
    %v338 = vsel %vm207, %v308, 0.0
    %339 = vadd.xlane.f32.xlu0 %v338
    %v340 = vpop.xlane.xlu0 %339
    %v341 = vsel %vm207, %v309, 0.0
    %342 = vadd.xlane.f32.xlu0 %v341
    %v343 = vpop.xlane.xlu0 %342
    %v344 = vsel %vm207, %v310, 0.0
    %345 = vadd.xlane.f32.xlu0 %v344
    %v346 = vpop.xlane.xlu0 %345
    %v347 = vsel %vm207, %v311, 0.0
    %348 = vadd.xlane.f32.xlu0 %v347
    %v349 = vpop.xlane.xlu0 %348
    %v350 = vsel %vm207, %v312, 0.0
    %351 = vadd.xlane.f32.xlu0 %v350
    %v352 = vpop.xlane.xlu0 %351
    %v353 = vsel %vm207, %v313, 0.0
    %354 = vadd.xlane.f32.xlu0 %v353
    %v355 = vpop.xlane.xlu0 %354
    %v356 = vsel %vm207, %v314, 0.0
    %357 = vadd.xlane.f32.xlu0 %v356
    %v358 = vpop.xlane.xlu0 %357
    %v359 = vsel %vm207, %v315, 0.0
    %360 = vadd.xlane.f32.xlu0 %v359
    %v361 = vpop.xlane.xlu0 %360
    %v362 = vsel %vm207, %v316, 0.0
    %363 = vadd.xlane.f32.xlu0 %v362
    %v364 = vpop.xlane.xlu0 %363
    %s365 = sld [smem:[#allocation2]]
    %v366 = vstv %s365
    %v367 = vadd.f32 %v319, %v366
    %v368 = vadd.f32 %v322, %v366
    %v369 = vadd.f32 %v325, %v366
    %v370 = vadd.f32 %v328, %v366
    %v371 = vadd.f32 %v331, %v366
    %v372 = vadd.f32 %v334, %v366
    %v373 = vadd.f32 %v337, %v366
    %v374 = vadd.f32 %v340, %v366
    %v375 = vadd.f32 %v343, %v366
    %v376 = vadd.f32 %v346, %v366
    %v377 = vadd.f32 %v349, %v366
    %v378 = vadd.f32 %v352, %v366
    %v379 = vadd.f32 %v355, %v366
    %v380 = vadd.f32 %v358, %v366
    %v381 = vadd.f32 %v361, %v366
    %v382 = vadd.f32 %v364, %v366
    %v399 = vlaneseq
    %v400 = vand.u32 %v399, 127
    %v401 = vperm.slane %v367, %v400
    %v402 = vadd.s32 %v400, 4294967288
    %v403 = vperm.slane %v368, %v402
    %vm404 = vcmask 130112
    %v405 = vsel %vm404, %v403, %v401
    %v406 = vadd.s32 %v400, 4294967280
    %v407 = vperm.slane %v369, %v406
    %vm408 = vcmask 195712
    %v409 = vsel %vm408, %v407, %v405
    %v410 = vadd.s32 %v400, 4294967272
    %v411 = vperm.slane %v370, %v410
    %vm412 = vcmask 261312
    %v413 = vsel %vm412, %v411, %v409
    %v414 = vadd.s32 %v400, 4294967264
    %v415 = vperm.slane %v371, %v414
    %vm416 = vcmask 326912
    %v417 = vsel %vm416, %v415, %v413
    %v418 = vadd.s32 %v400, 4294967256
    %v419 = vperm.slane %v372, %v418
    %vm420 = vcmask 392512
    %v421 = vsel %vm420, %v419, %v417
    %v422 = vadd.s32 %v400, 4294967248
    %v423 = vperm.slane %v373, %v422
    %vm424 = vcmask 458112
    %v425 = vsel %vm424, %v423, %v421
    %v426 = vadd.s32 %v400, 4294967240
    %v427 = vperm.slane %v374, %v426
    %vm428 = vcmask 523712
    %v429 = vsel %vm428, %v427, %v425
    %v430 = vadd.s32 %v400, 4294967232
    %v431 = vperm.slane %v375, %v430
    %vm432 = vcmask 589312
    %v433 = vsel %vm432, %v431, %v429
    %v434 = vadd.s32 %v400, 4294967224
    %v435 = vperm.slane %v376, %v434
    %vm436 = vcmask 654912
    %v437 = vsel %vm436, %v435, %v433
    %v438 = vadd.s32 %v400, 4294967216
    %v439 = vperm.slane %v377, %v438
    %vm440 = vcmask 720512
    %v441 = vsel %vm440, %v439, %v437
    %v442 = vadd.s32 %v400, 4294967208
    %v443 = vperm.slane %v378, %v442
    %vm444 = vcmask 786112
    %v445 = vsel %vm444, %v443, %v441
    %v446 = vadd.s32 %v400, 4294967200
    %v447 = vperm.slane %v379, %v446
    %vm448 = vcmask 851712
    %v449 = vsel %vm448, %v447, %v445
    %v450 = vadd.s32 %v400, 4294967192
    %v451 = vperm.slane %v380, %v450
    %vm452 = vcmask 917312
    %v453 = vsel %vm452, %v451, %v449
    %v454 = vadd.s32 %v400, 4294967184
    %v455 = vperm.slane %v381, %v454
    %vm456 = vcmask 982912
    %v457 = vsel %vm456, %v455, %v453
    %v458 = vadd.s32 %v400, 4294967176
    %v459 = vperm.slane %v382, %v458
    %vm460 = vcmask 1048512
    %v461 = vsel %vm460, %v459, %v457
    %463 = vst [vmem:[#allocation3] sm:$0x1] %v461
    // Predicated region
    $region30: #{tpu_custom_call.1} parent=1 // pred_check
      _
    $region31: #{tpu_custom_call.1} parent=1 // pred_check_branch
      %465 = sbr.rel (0) target = $region33
    $region32: #{tpu_custom_call.1} parent=1 // pred_region
      %467 = vsyncadd [#allocation4], 0
      %s469 = sshll.u32 [#allocation3], 4
      %s470 = int_to_ptr.vmem [resolvable:$true] %s469
      %s471 = sshll.u32 %s7, 4
      %s472 = int_to_ptr.hbm [resolvable:$true] %s471
      %474 = dma.vmem_to_hbm [thread:$0]  %s470, 16, %s472, [#allocation4]
    $region33: #{tpu_custom_call.1} parent=1 // pred_fallthru
      _
    // Predicated region
    $region34: #{tpu_custom_call.1} parent=1 // pred_check
      _
    $region35: #{tpu_custom_call.1} parent=1 // pred_check_branch
      %476 = sbr.rel (0) target = $region37
    $region36: #{tpu_custom_call.1} parent=1 // pred_region
      %478 = dma.done [#allocation4], 16
    $region37: #{tpu_custom_call.1} parent=1 // pred_fallthru
      _
    %479 = vsyncpa [#allocation4], 1

</llo_original>
